<compile_context>
chip_gen: v5e
topology: v5e:2x2
jax: 0.10.0
libtpu: 0.0.40
codegen_flags: <defaults>
</compile_context>

<pallas_src>
import jax
import jax.numpy as jnp
import numpy as np
from jax.experimental import pallas as pl
from jax.experimental.pallas import tpu as pltpu

LANE = 128  # TPU lane width


# ----------------------------------------------------------------------------
# Kernel 1: column-wise L2 normalization of the bank  (dim, size)
# ----------------------------------------------------------------------------
def _normalize_cols_kernel(x_ref, o_ref):
    x = x_ref[...]                                        # (dim, TILE)
    sumsq = jnp.sum(x * x, axis=0, keepdims=True)         # (1, TILE)
    # torch.nn.functional.normalize: x / max(||x||, eps), eps=1e-12
    inv = jax.lax.rsqrt(jnp.maximum(sumsq, 1e-24))        # 1/max(||x||, 1e-12)
    o_ref[...] = x * inv


def _pick_lane_tile(size: int, max_tile: int = 2048) -> int:
    """Largest 128*2^k <= max_tile dividing size (single block for odd sizes)."""
    if size % LANE != 0:
        return size        # TODO(synk): non-128-multiple sizes take one block
    t = LANE
    while t * 2 <= max_tile and size % (t * 2) == 0:
        t *= 2
    return t


def normalize_columns(x):
    """torch.nn.functional.normalize(x, dim=0) for a (dim, size) bank."""
    dim, size = x.shape
    tile = _pick_lane_tile(size)
    return pl.pallas_call(
        _normalize_cols_kernel,
        out_shape=jax.ShapeDtypeStruct((dim, size), x.dtype),
        grid=(size // tile,),
        in_specs=[pl.BlockSpec((dim, tile), lambda i: (0, i))],
        out_specs=pl.BlockSpec((dim, tile), lambda i: (0, i)),
        compiler_params=pltpu.CompilerParams(
            dimension_semantics=("parallel",)),
    )(x)


# ----------------------------------------------------------------------------
# Kernel 2: dequeue-and-enqueue — write batch.T into bank columns at ptr,
#           touching only the 128-wide tiles that overlap [ptr, ptr+n).
# ----------------------------------------------------------------------------
def _enqueue_kernel(params_ref, payload_ref, bank_ref, out_ref):
    # params = [tile0, off, n_write] in SMEM (scalar prefetched).
    i = pl.program_id(0)
    off = params_ref[1]
    n = params_ref[2]
    lane = jax.lax.broadcasted_iota(jnp.int32, out_ref.shape, 1)   # (dim, 128)
    payload_col = lane + i * LANE          # column within the payload strip
    mask = (payload_col >= off) & (payload_col < off + n)
    out_ref[...] = jnp.where(mask, payload_ref[...], bank_ref[...])


def _enqueue_fallback(bank, batch, ptr):
    # TODO(synk): degenerate shapes (size not a multiple of 128, or batch within
    # 128 columns of the full bank) take a plain-JAX full-bank update.
    dim, size = bank.shape
    bsz = batch.shape[0]
    wrap = (ptr + bsz) >= size
    n_write = jnp.where(wrap, size - ptr, bsz).astype(jnp.int32)
    k = min(bsz, size)
    placed = jnp.zeros((dim, size), bank.dtype).at[:, :k].set(
        batch[:k].T.astype(bank.dtype))
    placed = jnp.roll(placed, ptr, axis=1)
    col = jax.lax.broadcasted_iota(jnp.int32, (dim, size), 1)
    mask = (col >= ptr) & (col < ptr + n_write)
    new_bank = jnp.where(mask, placed, bank)
    new_ptr = jnp.where(wrap, 0, ptr + bsz).astype(jnp.int32)
    return new_bank, new_ptr


def enqueue(bank, batch, ptr):
    """Functional equivalent of MemoryBankModule._dequeue_and_enqueue."""
    dim, size = bank.shape
    bsz = batch.shape[0]
    ptr = jnp.asarray(ptr, jnp.int32)

    if size % LANE != 0 or bsz == 0 or bsz + LANE > size:
        return _enqueue_fallback(bank, batch, ptr)

    n_bank_tiles = size // LANE
    n_grid = pl.cdiv(bsz, LANE) + 1        # +1: ptr may be lane-unaligned
    strip_w = n_grid * LANE                # payload strip width (>= bsz + 128)

    wrap = (ptr + bsz) >= size
    n_write = jnp.where(wrap, size - ptr, bsz).astype(jnp.int32)
    tile0 = ptr // LANE
    off = ptr % LANE

    # Small (dim, strip_w) payload: batch.T placed at lane offset `off` so
    # payload column j corresponds to bank column tile0*LANE + j.
    batch_t = batch.T.astype(bank.dtype)
    payload = jax.lax.dynamic_update_slice(
        jnp.zeros((dim, strip_w), bank.dtype), batch_t, (jnp.int32(0), off))

    params = jnp.stack([tile0, off, n_write]).astype(jnp.int32)

    # Touched tiles only; iterations whose nominal tile falls past the end of
    # the bank wrap (mod n_bank_tiles) and are fully masked off in the kernel.
    bank_idx = lambda i, p: (0, (p[0] + i) % n_bank_tiles)

    itemsize = jnp.dtype(bank.dtype).itemsize
    new_bank = pl.pallas_call(
        _enqueue_kernel,
        out_shape=jax.ShapeDtypeStruct((dim, size), bank.dtype),
        grid_spec=pltpu.PrefetchScalarGridSpec(
            num_scalar_prefetch=1,
            grid=(n_grid,),
            in_specs=[
                pl.BlockSpec((dim, LANE), lambda i, p: (0, i)),   # payload strip
                pl.BlockSpec((dim, LANE), bank_idx),              # touched bank tiles
            ],
            out_specs=pl.BlockSpec((dim, LANE), bank_idx),
        ),
        # bank is operand 2 (scalar prefetch counts); aliasing it to output 0
        # means untouched columns are never moved; under jit + donation the
        # update is truly in place in HBM.
        input_output_aliases={2: 0},
        cost_estimate=pl.CostEstimate(
            flops=0, transcendentals=0,
            bytes_accessed=int(3 * dim * strip_w * itemsize)),
        compiler_params=pltpu.CompilerParams(
            dimension_semantics=("arbitrary",)),
    )(params, payload, bank)

    new_ptr = jnp.where(wrap, 0, ptr + bsz).astype(jnp.int32)
    return new_bank, new_ptr


# ----------------------------------------------------------------------------
# Module wrapper (stateful glue; kernels above do the data movement)
# ----------------------------------------------------------------------------
class MemoryBankModule:
    def __init__(self, size: int = 2 ** 16, seed: int = 42):
        if size < 0:
            raise ValueError(f"Illegal memory bank size {size}, must be non-negative.")
        self.size = size
        self.bank = None
        self.bank_ptr = None
        self._seed = seed

    def _init_memory_bank(self, dim: int):
        key = jax.random.PRNGKey(self._seed)          # stand-in for torch.randn
        raw = jax.random.normal(key, (dim, self.size), dtype=jnp.float32)
        self.bank = normalize_columns(raw)            # Pallas kernel
        self.bank_ptr = jnp.int32(0)

    def _dequeue_and_enqueue(self, batch):
        # single device: concat_all_gather is the identity
        self.bank, self.bank_ptr = enqueue(self.bank, batch, self.bank_ptr)

    def forward(self, output, labels=None, update: bool = False):
        if self.size == 0:
            return output, None
        _, dim = output.shape
        if self.bank is None:
            self._init_memory_bank(dim)
        # JAX arrays are immutable: returning self.bank matches clone().detach()
        # (the aliased enqueue produces a new value; XLA copies if not donated).
        bank = self.bank
        if update:
            self._dequeue_and_enqueue(output)
        return output, bank


# ----------------------------------------------------------------------------
if __name__ == "__main__":
    B, DIM, SIZE = 8, 32, 4096

    key = jax.random.PRNGKey(0)
    output = jax.random.normal(key, (B, DIM), dtype=jnp.float32)

    mb = MemoryBankModule(size=SIZE, seed=42)

    out1, bank1 = mb.forward(output, update=True)    # init, return pre-update bank
    out2, bank2 = mb.forward(output, update=False)   # bank now holds batch in cols [0, B)
    jax.block_until_ready((out1, bank1, out2, bank2, mb.bank, mb.bank_ptr))

    # --- reference checks (numpy) ---
    raw = np.asarray(jax.random.normal(jax.random.PRNGKey(42), (DIM, SIZE),
                                       dtype=jnp.float32))
    norms = np.sqrt((raw ** 2).sum(axis=0, keepdims=True))
    ref_init = raw / np.maximum(norms, 1e-12)
    np.testing.assert_allclose(np.asarray(bank1), ref_init, rtol=1e-5, atol=1e-5)
    np.testing.assert_allclose(np.asarray(out1), np.asarray(output))

    ref_after = ref_init.copy()
    ref_after[:, :B] = np.asarray(output).T
    np.testing.assert_allclose(np.asarray(bank2), ref_after, rtol=1e-5, atol=1e-5)
    assert int(mb.bank_ptr) == B

    # unaligned enqueue crossing a 128-lane tile boundary: cols [124, 132)
    bank3, ptr3 = enqueue(mb.bank, output, jnp.int32(124))
    jax.block_until_ready((bank3, ptr3))
    ref3 = np.asarray(mb.bank).copy()
    ref3[:, 124:132] = np.asarray(output).T
    np.testing.assert_allclose(np.asarray(bank3), ref3, rtol=1e-5, atol=1e-5)
    assert int(ptr3) == 132

    # wrapping enqueue near the end of the bank: only size-ptr columns written
    bank4, ptr4 = enqueue(mb.bank, output, jnp.int32(SIZE - 4))
    jax.block_until_ready((bank4, ptr4))
    ref4 = np.asarray(mb.bank).copy()
    ref4[:, SIZE - 4:] = np.asarray(output)[:4].T
    np.testing.assert_allclose(np.asarray(bank4), ref4, rtol=1e-5, atol=1e-5)
    assert int(ptr4) == 0

    print("KERNEL_OK")
</pallas_src>

<mosaic_0001>
module attributes {stable_mosaic.version = 11 : i64} {
  func.func @_normalize_cols_kernel(%arg0: i32, %arg1: memref<32x2048xf32, #tpu.memory_space<vmem>>, %arg2: memref<32x2048xf32, #tpu.memory_space<vmem>>) attributes {dimension_semantics = [#tpu.dimension_semantics<parallel>], iteration_bounds = array<i64: 2>, scalar_prefetch = 0 : i64, scratch_operands = 0 : i64, tpu.core_type = #tpu.core_type<tc>, window_params = [{transform_indices = @transform_0, window_bounds = array<i64: 32, 2048>}, {transform_indices = @transform_1, window_bounds = array<i64: 32, 2048>}]} {
    %c0 = arith.constant 0 : index
    %c0_0 = arith.constant 0 : index
    %0 = vector.load %arg1[%c0, %c0_0] : memref<32x2048xf32, #tpu.memory_space<vmem>>, vector<32x2048xf32>
    %1 = arith.mulf %0, %0 : vector<32x2048xf32>
    %cst = arith.constant dense<0.000000e+00> : vector<2048xf32>
    %2 = vector.multi_reduction <add>, %1, %cst [0] : vector<32x2048xf32> to vector<2048xf32>
    %3 = vector.shape_cast %2 : vector<2048xf32> to vector<1x2048xf32>
    %cst_1 = arith.constant 1.000000e-24 : f32
    %4 = vector.broadcast %cst_1 : f32 to vector<1x2048xf32>
    %5 = arith.maximumf %3, %4 : vector<1x2048xf32>
    %6 = math.rsqrt %5 : vector<1x2048xf32>
    %7 = vector.broadcast %6 : vector<1x2048xf32> to vector<32x2048xf32>
    %8 = arith.mulf %0, %7 : vector<32x2048xf32>
    %c0_2 = arith.constant 0 : index
    %c0_3 = arith.constant 0 : index
    %9 = vector.load %arg2[%c0_2, %c0_3] : memref<32x2048xf32, #tpu.memory_space<vmem>>, vector<32x2048xf32>
    tpu.vector_store %arg2[%c0_2, %c0_3], %8 {strides = array<i32>} : memref<32x2048xf32, #tpu.memory_space<vmem>>, vector<32x2048xf32>,
    return
  }
  func.func @transform_0(%arg0: i32) -> (i32, i32) {
    %c0_i32 = arith.constant 0 : i32
    %c0_i32_0 = arith.constant 0 : i32
    return %c0_i32, %arg0 : i32, i32
  }
  func.func @transform_1(%arg0: i32) -> (i32, i32) {
    %c0_i32 = arith.constant 0 : i32
    %c0_i32_0 = arith.constant 0 : i32
    return %c0_i32, %arg0 : i32, i32
  }
}

</mosaic_0001>

<llo_original>
// kernel: tpu_custom_call.1
$region0: #{tpu_custom_call.1}
  #allocation0 [shape = 'u32[]', space=smem, size = 0x4, offset = 0x4, fixed_abs, tag = 'smem constant byte address 0x4 - core index']
  #allocation1 [shape = 'u32[72,128]{1,0:T(1,128)}', space=vmem, size = 0x9000, scoped, tag = 'internal scratch']
  %s0 = inlined_call_operand.hbm [shape: f32[32,4096], index: 0, kind: input, shape index: {}]
  %s1 = inlined_call_operand.hbm [shape: f32[32,4096], index: 1, kind: output, shape index: {}]
  %s2 = sld [smem:[#allocation0]]
  $region41: #{tpu_custom_call.1} parent=0
    _
  %s4 = ssub.s32 1, %s2
  %s5 = scalar_select 0, %s4, %s2
  $region1: #{tpu_custom_call.1} parent=0
    #allocation2 [shape = 'u8[524288]{0}', space=vmem, size = 0x80000, scoped, tag = 'input window, operand 0']
    #allocation3 [shape = 's32[2]{0}', space=sflag, size = 0x8, scoped, tag = 'scoped memory for tpu_custom_call.1']
    #allocation4 [shape = 's32[2]{0}', space=sflag, size = 0x8, scoped, tag = 'scoped memory for tpu_custom_call.1']
    #allocation5 [shape = 'u8[524288]{0}', space=vmem, size = 0x80000, scoped, tag = 'output window, operand 0']
    %6 = vsyncpa [#allocation3], 0
    %s7 = scalar_lea.sflag [#allocation3], 1
    %8 = vsyncpa %s7, 0
    %9 = vsyncpa [#allocation4], 0
    %s10 = scalar_lea.sflag [#allocation4], 1
    %11 = vsyncpa %s10, 0
    loop: start=0, step=1, limit=4
    $region2: #{tpu_custom_call.1} parent=1 // loop_pre_header
      _
    $region3: #{tpu_custom_call.1} parent=1 // loop_header
      %s13 = sphi 0, %s17
      %p14 = scmp.ge.s32.totalorder %s13, 4
      %s23 = sphi 0, %s25
      %s26 = sphi 0, %s23
      %s27 = sphi 0, %s26
      %s43 = sphi 0, %s27
      %s49 = sphi 0, %s51
      %s52 = sphi 0, %s49
      %s53 = sphi 0, %s52
      %s69 = sphi 0, %s53
    $region4: #{tpu_custom_call.1} parent=1 // loop_header_branch
      %16 = sbr.rel (%p14) target = $region8
    $region5: #{tpu_custom_call.1} parent=1 // loop_body
      %s18 = ssub.s32 %s13, 1
      %s19 = ssub.s32 %s13, 2
      %s20 = sadd.s32 %s13, 1
      %s21 = ssub.s32 %s13, %s20
      %p22 = scmp.eq.s32.totalorder %s21, 0
      %s24 = sadd.s32 %s23, 1
      %s25 = scalar_select %p22, %s23, %s24
      %p28 = pneg %p22
      %p29 = scmp.eq.s32.totalorder %s13, 1
      %p30 = por %p28, %p29
      %p31 = scmp.ne.s32.totalorder %s23, %s26
      %p32 = scmp.eq.s32.totalorder %s13, 0
      %p33 = por %p31, %p32
      %p34 = scmp.ne.s32.totalorder %s23, %s26
      %p35 = scmp.eq.s32.totalorder %s18, 1
      %p36 = por %p34, %p35
      %p37 = scmp.ne.s32.totalorder %s26, %s27
      %p38 = scmp.eq.s32.totalorder %s18, 0
      %p39 = por %p37, %p38
      %p40 = scmp.ne.s32.totalorder %s26, %s27
      %p41 = scmp.eq.s32.totalorder %s19, 1
      %p42 = por %p40, %p41
      %p44 = scmp.ne.s32.totalorder %s27, %s43
      %p45 = scmp.eq.s32.totalorder %s19, 0
      %p46 = por %p44, %p45
      %s47 = ssub.s32 %s13, %s20
      %p48 = scmp.eq.s32.totalorder %s47, 0
      %s50 = sadd.s32 %s49, 1
      %s51 = scalar_select %p48, %s49, %s50
      %p54 = pneg %p48
      %p55 = scmp.eq.s32.totalorder %s13, 1
      %p56 = por %p54, %p55
      %p57 = scmp.ne.s32.totalorder %s49, %s52
      %p58 = scmp.eq.s32.totalorder %s13, 0
      %p59 = por %p57, %p58
      %p60 = scmp.ne.s32.totalorder %s49, %s52
      %p61 = scmp.eq.s32.totalorder %s18, 1
      %p62 = por %p60, %p61
      %p63 = scmp.ne.s32.totalorder %s52, %s53
      %p64 = scmp.eq.s32.totalorder %s18, 0
      %p65 = por %p63, %p64
      %p66 = scmp.ne.s32.totalorder %s52, %s53
      %p67 = scmp.eq.s32.totalorder %s19, 1
      %p68 = por %p66, %p67
      %p70 = scmp.ne.s32.totalorder %s53, %s69
      %p71 = scmp.eq.s32.totalorder %s19, 0
      %p72 = por %p70, %p71
      %p73 = scmp.le.s32.totalorder 1, %s13
      %p74 = scmp.lt.s32.totalorder %s13, 3
      %p75 = pnand %p73, %p74
      %p76 = pneg %p75
      // Predicated region
      $region9: #{tpu_custom_call.1} parent=5 // pred_check
        _
      $region10: #{tpu_custom_call.1} parent=5 // pred_check_branch
        %78 = sbr.rel (%p75) target = $region12
      $region11: #{tpu_custom_call.1} parent=5 // pred_region
        %s79 = ssub.s32 %s13, 1
      $region12: #{tpu_custom_call.1} parent=5 // pred_fallthru
        _
      %p80 = scmp.lt.s32.totalorder %s13, 2
      // Predicated region
      $region13: #{tpu_custom_call.1} parent=5 // pred_check
        %p81 = pneg %p80
      $region14: #{tpu_custom_call.1} parent=5 // pred_check_branch
        %83 = sbr.rel (%p81) target = $region16
      $region15: #{tpu_custom_call.1} parent=5 // pred_region
        // Predicated region
        $region17: #{tpu_custom_call.1} parent=15 // pred_check
          %p84 = pneg %p33
        $region18: #{tpu_custom_call.1} parent=15 // pred_check_branch
          %86 = sbr.rel (%p84) target = $region20
        $region19: #{tpu_custom_call.1} parent=15 // pred_region
          %s87 = sand.u32 %s23, 1
          %s88 = scalar_lea.sflag [#allocation3], %s87
          %s89 = sand.u32 %s23, 1
          %s90 = smul.addr %s89, 512
          %s91 = scalar_lea.vmem [#allocation2], %s90
          %s92 = smul.u32 16, %s13
          %94 = vsyncadd %s88, 0
          %s95 = smul.addr %s92, 8
          %s96 = scalar_lea.hbm %s0, %s95
          %s97 = sshll.u32 %s96, 4
          %s98 = int_to_ptr.hbm [resolvable:$true] %s97
          %s99 = sshll.u32 %s91, 4
          %s100 = int_to_ptr.vmem [resolvable:$true] %s99
          %105 = dma.hbm_to_vmem [thread:$0]  %s98, 8192, %s100, %s88, 4096, 2048, 128
        $region20: #{tpu_custom_call.1} parent=15 // pred_fallthru
          _
      $region16: #{tpu_custom_call.1} parent=5 // pred_fallthru
        _
      %p106 = scmp.le.s32.totalorder 1, %s13
      %p107 = scmp.lt.s32.totalorder %s13, 3
      %p108 = pnand %p106, %p107
      %p109 = pneg %p108
      // Predicated region
      $region21: #{tpu_custom_call.1} parent=5 // pred_check
        _
      $region22: #{tpu_custom_call.1} parent=5 // pred_check_branch
        %111 = sbr.rel (%p108) target = $region24
      $region23: #{tpu_custom_call.1} parent=5 // pred_region
        %s112 = ssub.s32 %s13, 1
        %s113 = sand.u32 %s26, 1
        %s114 = scalar_lea.sflag [#allocation3], %s113
        %s115 = sand.u32 %s26, 1
        %s116 = smul.addr %s115, 512
        %s117 = scalar_lea.vmem [#allocation2], %s116
        // Predicated region
        $region25: #{tpu_custom_call.1} parent=23 // pred_check
          %p118 = pneg %p39
        $region26: #{tpu_custom_call.1} parent=23 // pred_check_branch
          %120 = sbr.rel (%p118) target = $region28
        $region27: #{tpu_custom_call.1} parent=23 // pred_region
          %122 = dma.done %s114, 8192
        $region28: #{tpu_custom_call.1} parent=23 // pred_fallthru
          _
        %s123 = sand.u32 %s26, 1
        %s124 = scalar_lea.sflag [#allocation3], %s123
        %s125 = sand.u32 %s26, 1
        %s126 = smul.addr %s125, 512
        %s127 = scalar_lea.vmem [#allocation2], %s126
        %p128 = pneg %p39
        %p129 = pneg %p36
        %p130 = pneg %p65
        %p131 = pneg %p62
        %s132 = sand.u32 %s52, 1
        %s133 = scalar_lea.sflag [#allocation4], %s132
        %s134 = sand.u32 %s52, 1
        %s135 = smul.addr %s134, 512
        %s136 = scalar_lea.vmem [#allocation5], %s135
        %s137 = smul.u32 16, %s18
        %s138 = smul.u32 16, %s18
        %v139 = vld [vmem:[%s117] sm:$0xff]
        %v140 = vld [vmem:[%s117 + $0x8] sm:$0xff]
        %v141 = vld [vmem:[%s117 + $0x10] sm:$0xff]
        %v142 = vld [vmem:[%s117 + $0x18] sm:$0xff]
        %v143 = vld [vmem:[%s117 + $0x20] sm:$0xff]
        %v144 = vld [vmem:[%s117 + $0x28] sm:$0xff]
        %v145 = vld [vmem:[%s117 + $0x30] sm:$0xff]
        %v146 = vld [vmem:[%s117 + $0x38] sm:$0xff]
        %v147 = vld [vmem:[%s117 + $0x40] sm:$0xff]
        %v148 = vld [vmem:[%s117 + $0x48] sm:$0xff]
        %v149 = vld [vmem:[%s117 + $0x50] sm:$0xff]
        %v150 = vld [vmem:[%s117 + $0x58] sm:$0xff]
        %v151 = vld [vmem:[%s117 + $0x60] sm:$0xff]
        %v152 = vld [vmem:[%s117 + $0x68] sm:$0xff]
        %v153 = vld [vmem:[%s117 + $0x70] sm:$0xff]
        %v154 = vld [vmem:[%s117 + $0x78] sm:$0xff]
        %v155 = vld [vmem:[%s117 + $0x80] sm:$0xff]
        %v156 = vld [vmem:[%s117 + $0x88] sm:$0xff]
        %v157 = vld [vmem:[%s117 + $0x90] sm:$0xff]
        %v158 = vld [vmem:[%s117 + $0x98] sm:$0xff]
        %v159 = vld [vmem:[%s117 + $0xa0] sm:$0xff]
        %v160 = vld [vmem:[%s117 + $0xa8] sm:$0xff]
        %v161 = vld [vmem:[%s117 + $0xb0] sm:$0xff]
        %v162 = vld [vmem:[%s117 + $0xb8] sm:$0xff]
        %v163 = vld [vmem:[%s117 + $0xc0] sm:$0xff]
        %v164 = vld [vmem:[%s117 + $0xc8] sm:$0xff]
        %v165 = vld [vmem:[%s117 + $0xd0] sm:$0xff]
        %v166 = vld [vmem:[%s117 + $0xd8] sm:$0xff]
        %v167 = vld [vmem:[%s117 + $0xe0] sm:$0xff]
        %v168 = vld [vmem:[%s117 + $0xe8] sm:$0xff]
        %v169 = vld [vmem:[%s117 + $0xf0] sm:$0xff]
        %v170 = vld [vmem:[%s117 + $0xf8] sm:$0xff]
        %v171 = vld [vmem:[%s117 + $0x100] sm:$0xff]
        %v172 = vld [vmem:[%s117 + $0x108] sm:$0xff]
        %v173 = vld [vmem:[%s117 + $0x110] sm:$0xff]
        %v174 = vld [vmem:[%s117 + $0x118] sm:$0xff]
        %v175 = vld [vmem:[%s117 + $0x120] sm:$0xff]
        %v176 = vld [vmem:[%s117 + $0x128] sm:$0xff]
        %v177 = vld [vmem:[%s117 + $0x130] sm:$0xff]
        %v178 = vld [vmem:[%s117 + $0x138] sm:$0xff]
        %v179 = vld [vmem:[%s117 + $0x140] sm:$0xff]
        %v180 = vld [vmem:[%s117 + $0x148] sm:$0xff]
        %v181 = vld [vmem:[%s117 + $0x150] sm:$0xff]
        %v182 = vld [vmem:[%s117 + $0x158] sm:$0xff]
        %v183 = vld [vmem:[%s117 + $0x160] sm:$0xff]
        %v184 = vld [vmem:[%s117 + $0x168] sm:$0xff]
        %v185 = vld [vmem:[%s117 + $0x170] sm:$0xff]
        %v186 = vld [vmem:[%s117 + $0x178] sm:$0xff]
        %v187 = vld [vmem:[%s117 + $0x180] sm:$0xff]
        %v188 = vld [vmem:[%s117 + $0x188] sm:$0xff]
        %v189 = vld [vmem:[%s117 + $0x190] sm:$0xff]
        %v190 = vld [vmem:[%s117 + $0x198] sm:$0xff]
        %v191 = vld [vmem:[%s117 + $0x1a0] sm:$0xff]
        %v192 = vld [vmem:[%s117 + $0x1a8] sm:$0xff]
        %v193 = vld [vmem:[%s117 + $0x1b0] sm:$0xff]
        %v194 = vld [vmem:[%s117 + $0x1b8] sm:$0xff]
        %v195 = vld [vmem:[%s117 + $0x1c0] sm:$0xff]
        %v196 = vld [vmem:[%s117 + $0x1c8] sm:$0xff]
        %v197 = vld [vmem:[%s117 + $0x1d0] sm:$0xff]
        %v198 = vld [vmem:[%s117 + $0x1d8] sm:$0xff]
        %v199 = vld [vmem:[%s117 + $0x1e0] sm:$0xff]
        %v200 = vld [vmem:[%s117 + $0x1e8] sm:$0xff]
        %v201 = vld [vmem:[%s117 + $0x1f0] sm:$0xff]
        %v202 = vld [vmem:[%s117 + $0x1f8] sm:$0xff]
        %v203 = vmul.f32 %v139, %v139
        %v204 = vmul.f32 %v140, %v140
        %v205 = vmul.f32 %v141, %v141
        %v206 = vmul.f32 %v142, %v142
        %v207 = vmul.f32 %v143, %v143
        %v208 = vmul.f32 %v144, %v144
        %v209 = vmul.f32 %v145, %v145
        %v210 = vmul.f32 %v146, %v146
        %v211 = vmul.f32 %v147, %v147
        %v212 = vmul.f32 %v148, %v148
        %v213 = vmul.f32 %v149, %v149
        %v214 = vmul.f32 %v150, %v150
        %v215 = vmul.f32 %v151, %v151
        %v216 = vmul.f32 %v152, %v152
        %v217 = vmul.f32 %v153, %v153
        %v218 = vmul.f32 %v154, %v154
        %v219 = vmul.f32 %v155, %v155
        %v220 = vmul.f32 %v156, %v156
        %v221 = vmul.f32 %v157, %v157
        %v222 = vmul.f32 %v158, %v158
        %v223 = vmul.f32 %v159, %v159
        %v224 = vmul.f32 %v160, %v160
        %v225 = vmul.f32 %v161, %v161
        %v226 = vmul.f32 %v162, %v162
        %v227 = vmul.f32 %v163, %v163
        %v228 = vmul.f32 %v164, %v164
        %v229 = vmul.f32 %v165, %v165
        %v230 = vmul.f32 %v166, %v166
        %v231 = vmul.f32 %v167, %v167
        %v232 = vmul.f32 %v168, %v168
        %v233 = vmul.f32 %v169, %v169
        %v234 = vmul.f32 %v170, %v170
        %v235 = vmul.f32 %v171, %v171
        %v236 = vmul.f32 %v172, %v172
        %v237 = vmul.f32 %v173, %v173
        %v238 = vmul.f32 %v174, %v174
        %v239 = vmul.f32 %v175, %v175
        %v240 = vmul.f32 %v176, %v176
        %v241 = vmul.f32 %v177, %v177
        %v242 = vmul.f32 %v178, %v178
        %v243 = vmul.f32 %v179, %v179
        %v244 = vmul.f32 %v180, %v180
        %v245 = vmul.f32 %v181, %v181
        %v246 = vmul.f32 %v182, %v182
        %v247 = vmul.f32 %v183, %v183
        %v248 = vmul.f32 %v184, %v184
        %v249 = vmul.f32 %v185, %v185
        %v250 = vmul.f32 %v186, %v186
        %v251 = vmul.f32 %v187, %v187
        %v252 = vmul.f32 %v188, %v188
        %v253 = vmul.f32 %v189, %v189
        %v254 = vmul.f32 %v190, %v190
        %v255 = vmul.f32 %v191, %v191
        %v256 = vmul.f32 %v192, %v192
        %v257 = vmul.f32 %v193, %v193
        %v258 = vmul.f32 %v194, %v194
        %v259 = vmul.f32 %v195, %v195
        %v260 = vmul.f32 %v196, %v196
        %v261 = vmul.f32 %v197, %v197
        %v262 = vmul.f32 %v198, %v198
        %v263 = vmul.f32 %v199, %v199
        %v264 = vmul.f32 %v200, %v200
        %v265 = vmul.f32 %v201, %v201
        %v266 = vmul.f32 %v202, %v202
        %v267 = vadd.f32 %v203, %v219
        %v268 = vadd.f32 %v267, %v235
        %v269 = vadd.f32 %v268, %v251
        %v270 = vrot.slane %v269, 4
        %v271 = vadd.f32 %v269, %v270
        %v272 = vrot.slane %v271, 2
        %v273 = vadd.f32 %v271, %v272
        %v274 = vrot.slane %v273, 1
        %v275 = vadd.f32 %v273, %v274
        %v276 = vadd.f32 %v204, %v220
        %v277 = vadd.f32 %v276, %v236
        %v278 = vadd.f32 %v277, %v252
        %v279 = vrot.slane %v278, 4
        %v280 = vadd.f32 %v278, %v279
        %v281 = vrot.slane %v280, 2
        %v282 = vadd.f32 %v280, %v281
        %v283 = vrot.slane %v282, 1
        %v284 = vadd.f32 %v282, %v283
        %v285 = vadd.f32 %v205, %v221
        %v286 = vadd.f32 %v285, %v237
        %v287 = vadd.f32 %v286, %v253
        %v288 = vrot.slane %v287, 4
        %v289 = vadd.f32 %v287, %v288
        %v290 = vrot.slane %v289, 2
        %v291 = vadd.f32 %v289, %v290
        %v292 = vrot.slane %v291, 1
        %v293 = vadd.f32 %v291, %v292
        %v294 = vadd.f32 %v206, %v222
        %v295 = vadd.f32 %v294, %v238
        %v296 = vadd.f32 %v295, %v254
        %v297 = vrot.slane %v296, 4
        %v298 = vadd.f32 %v296, %v297
        %v299 = vrot.slane %v298, 2
        %v300 = vadd.f32 %v298, %v299
        %v301 = vrot.slane %v300, 1
        %v302 = vadd.f32 %v300, %v301
        %v303 = vadd.f32 %v207, %v223
        %v304 = vadd.f32 %v303, %v239
        %v305 = vadd.f32 %v304, %v255
        %v306 = vrot.slane %v305, 4
        %v307 = vadd.f32 %v305, %v306
        %v308 = vrot.slane %v307, 2
        %v309 = vadd.f32 %v307, %v308
        %v310 = vrot.slane %v309, 1
        %v311 = vadd.f32 %v309, %v310
        %v312 = vadd.f32 %v208, %v224
        %v313 = vadd.f32 %v312, %v240
        %v314 = vadd.f32 %v313, %v256
        %v315 = vrot.slane %v314, 4
        %v316 = vadd.f32 %v314, %v315
        %v317 = vrot.slane %v316, 2
        %v318 = vadd.f32 %v316, %v317
        %v319 = vrot.slane %v318, 1
        %v320 = vadd.f32 %v318, %v319
        %v321 = vadd.f32 %v209, %v225
        %v322 = vadd.f32 %v321, %v241
        %v323 = vadd.f32 %v322, %v257
        %v324 = vrot.slane %v323, 4
        %v325 = vadd.f32 %v323, %v324
        %v326 = vrot.slane %v325, 2
        %v327 = vadd.f32 %v325, %v326
        %v328 = vrot.slane %v327, 1
        %v329 = vadd.f32 %v327, %v328
        %v330 = vadd.f32 %v210, %v226
        %v331 = vadd.f32 %v330, %v242
        %v332 = vadd.f32 %v331, %v258
        %v333 = vrot.slane %v332, 4
        %v334 = vadd.f32 %v332, %v333
        %v335 = vrot.slane %v334, 2
        %v336 = vadd.f32 %v334, %v335
        %v337 = vrot.slane %v336, 1
        %v338 = vadd.f32 %v336, %v337
        %v339 = vadd.f32 %v211, %v227
        %v340 = vadd.f32 %v339, %v243
        %v341 = vadd.f32 %v340, %v259
        %v342 = vrot.slane %v341, 4
        %v343 = vadd.f32 %v341, %v342
        %v344 = vrot.slane %v343, 2
        %v345 = vadd.f32 %v343, %v344
        %v346 = vrot.slane %v345, 1
        %v347 = vadd.f32 %v345, %v346
        %v348 = vadd.f32 %v212, %v228
        %v349 = vadd.f32 %v348, %v244
        %v350 = vadd.f32 %v349, %v260
        %v351 = vrot.slane %v350, 4
        %v352 = vadd.f32 %v350, %v351
        %v353 = vrot.slane %v352, 2
        %v354 = vadd.f32 %v352, %v353
        %v355 = vrot.slane %v354, 1
        %v356 = vadd.f32 %v354, %v355
        %v357 = vadd.f32 %v213, %v229
        %v358 = vadd.f32 %v357, %v245
        %v359 = vadd.f32 %v358, %v261
        %v360 = vrot.slane %v359, 4
        %v361 = vadd.f32 %v359, %v360
        %v362 = vrot.slane %v361, 2
        %v363 = vadd.f32 %v361, %v362
        %v364 = vrot.slane %v363, 1
        %v365 = vadd.f32 %v363, %v364
        %v366 = vadd.f32 %v214, %v230
        %v367 = vadd.f32 %v366, %v246
        %v368 = vadd.f32 %v367, %v262
        %v369 = vrot.slane %v368, 4
        %v370 = vadd.f32 %v368, %v369
        %v371 = vrot.slane %v370, 2
        %v372 = vadd.f32 %v370, %v371
        %v373 = vrot.slane %v372, 1
        %v374 = vadd.f32 %v372, %v373
        %v375 = vadd.f32 %v215, %v231
        %v376 = vadd.f32 %v375, %v247
        %v377 = vadd.f32 %v376, %v263
        %v378 = vrot.slane %v377, 4
        %v379 = vadd.f32 %v377, %v378
        %v380 = vrot.slane %v379, 2
        %v381 = vadd.f32 %v379, %v380
        %v382 = vrot.slane %v381, 1
        %v383 = vadd.f32 %v381, %v382
        %v384 = vadd.f32 %v216, %v232
        %v385 = vadd.f32 %v384, %v248
        %v386 = vadd.f32 %v385, %v264
        %v387 = vrot.slane %v386, 4
        %v388 = vadd.f32 %v386, %v387
        %v389 = vrot.slane %v388, 2
        %v390 = vadd.f32 %v388, %v389
        %v391 = vrot.slane %v390, 1
        %v392 = vadd.f32 %v390, %v391
        %v393 = vadd.f32 %v217, %v233
        %v394 = vadd.f32 %v393, %v249
        %v395 = vadd.f32 %v394, %v265
        %v396 = vrot.slane %v395, 4
        %v397 = vadd.f32 %v395, %v396
        %v398 = vrot.slane %v397, 2
        %v399 = vadd.f32 %v397, %v398
        %v400 = vrot.slane %v399, 1
        %v401 = vadd.f32 %v399, %v400
        %v402 = vadd.f32 %v218, %v234
        %v403 = vadd.f32 %v402, %v250
        %v404 = vadd.f32 %v403, %v266
        %v405 = vrot.slane %v404, 4
        %v406 = vadd.f32 %v404, %v405
        %v407 = vrot.slane %v406, 2
        %v408 = vadd.f32 %v406, %v407
        %v409 = vrot.slane %v408, 1
        %v410 = vadd.f32 %v408, %v409
        %v411 = vmax.f32 %v275, 1e-24
        %v412 = vmax.f32 %v284, 1e-24
        %v413 = vmax.f32 %v293, 1e-24
        %v414 = vmax.f32 %v302, 1e-24
        %v415 = vmax.f32 %v311, 1e-24
        %v416 = vmax.f32 %v320, 1e-24
        %v417 = vmax.f32 %v329, 1e-24
        %v418 = vmax.f32 %v338, 1e-24
        %v419 = vmax.f32 %v347, 1e-24
        %v420 = vmax.f32 %v356, 1e-24
        %v421 = vmax.f32 %v365, 1e-24
        %v422 = vmax.f32 %v374, 1e-24
        %v423 = vmax.f32 %v383, 1e-24
        %v424 = vmax.f32 %v392, 1e-24
        %v425 = vmax.f32 %v401, 1e-24
        %v426 = vmax.f32 %v410, 1e-24
        %v427 = vrsqrt.pop %v411
        %v428 = vmul.f32 %v427, %v411
        %v429 = vmul.f32 %v428, %v427
        %v430 = vmul.f32 0.5, %v429
        %v431 = vsub.f32 1.5, %v430
        %v432 = vmul.f32 %v427, %v431
        %vm433 = vweird.f32 %v411
        %vm434 = vweird.f32 %v427
        %vm435 = vmor %vm433, %vm434
        %v436 = vsel %vm435, %v427, %v432
        %v437 = vrsqrt.pop %v412
        %v438 = vmul.f32 %v437, %v412
        %v439 = vmul.f32 %v438, %v437
        %v440 = vmul.f32 0.5, %v439
        %v441 = vsub.f32 1.5, %v440
        %v442 = vmul.f32 %v437, %v441
        %vm443 = vweird.f32 %v412
        %vm444 = vweird.f32 %v437
        %vm445 = vmor %vm443, %vm444
        %v446 = vsel %vm445, %v437, %v442
        %v447 = vrsqrt.pop %v413
        %v448 = vmul.f32 %v447, %v413
        %v449 = vmul.f32 %v448, %v447
        %v450 = vmul.f32 0.5, %v449
        %v451 = vsub.f32 1.5, %v450
        %v452 = vmul.f32 %v447, %v451
        %vm453 = vweird.f32 %v413
        %vm454 = vweird.f32 %v447
        %vm455 = vmor %vm453, %vm454
        %v456 = vsel %vm455, %v447, %v452
        %v457 = vrsqrt.pop %v414
        %v458 = vmul.f32 %v457, %v414
        %v459 = vmul.f32 %v458, %v457
        %v460 = vmul.f32 0.5, %v459
        %v461 = vsub.f32 1.5, %v460
        %v462 = vmul.f32 %v457, %v461
        %vm463 = vweird.f32 %v414
        %vm464 = vweird.f32 %v457
        %vm465 = vmor %vm463, %vm464
        %v466 = vsel %vm465, %v457, %v462
        %v467 = vrsqrt.pop %v415
        %v468 = vmul.f32 %v467, %v415
        %v469 = vmul.f32 %v468, %v467
        %v470 = vmul.f32 0.5, %v469
        %v471 = vsub.f32 1.5, %v470
        %v472 = vmul.f32 %v467, %v471
        %vm473 = vweird.f32 %v415
        %vm474 = vweird.f32 %v467
        %vm475 = vmor %vm473, %vm474
        %v476 = vsel %vm475, %v467, %v472
        %v477 = vrsqrt.pop %v416
        %v478 = vmul.f32 %v477, %v416
        %v479 = vmul.f32 %v478, %v477
        %v480 = vmul.f32 0.5, %v479
        %v481 = vsub.f32 1.5, %v480
        %v482 = vmul.f32 %v477, %v481
        %vm483 = vweird.f32 %v416
        %vm484 = vweird.f32 %v477
        %vm485 = vmor %vm483, %vm484
        %v486 = vsel %vm485, %v477, %v482
        %v487 = vrsqrt.pop %v417
        %v488 = vmul.f32 %v487, %v417
        %v489 = vmul.f32 %v488, %v487
        %v490 = vmul.f32 0.5, %v489
        %v491 = vsub.f32 1.5, %v490
        %v492 = vmul.f32 %v487, %v491
        %vm493 = vweird.f32 %v417
        %vm494 = vweird.f32 %v487
        %vm495 = vmor %vm493, %vm494
        %v496 = vsel %vm495, %v487, %v492
        %v497 = vrsqrt.pop %v418
        %v498 = vmul.f32 %v497, %v418
        %v499 = vmul.f32 %v498, %v497
        %v500 = vmul.f32 0.5, %v499
        %v501 = vsub.f32 1.5, %v500
        %v502 = vmul.f32 %v497, %v501
        %vm503 = vweird.f32 %v418
        %vm504 = vweird.f32 %v497
        %vm505 = vmor %vm503, %vm504
        %v506 = vsel %vm505, %v497, %v502
        %v507 = vrsqrt.pop %v419
        %v508 = vmul.f32 %v507, %v419
        %v509 = vmul.f32 %v508, %v507
        %v510 = vmul.f32 0.5, %v509
        %v511 = vsub.f32 1.5, %v510
        %v512 = vmul.f32 %v507, %v511
        %vm513 = vweird.f32 %v419
        %vm514 = vweird.f32 %v507
        %vm515 = vmor %vm513, %vm514
        %v516 = vsel %vm515, %v507, %v512
        %v517 = vrsqrt.pop %v420
        %v518 = vmul.f32 %v517, %v420
        %v519 = vmul.f32 %v518, %v517
        %v520 = vmul.f32 0.5, %v519
        %v521 = vsub.f32 1.5, %v520
        %v522 = vmul.f32 %v517, %v521
        %vm523 = vweird.f32 %v420
        %vm524 = vweird.f32 %v517
        %vm525 = vmor %vm523, %vm524
        %v526 = vsel %vm525, %v517, %v522
        %v527 = vrsqrt.pop %v421
        %v528 = vmul.f32 %v527, %v421
        %v529 = vmul.f32 %v528, %v527
        %v530 = vmul.f32 0.5, %v529
        %v531 = vsub.f32 1.5, %v530
        %v532 = vmul.f32 %v527, %v531
        %vm533 = vweird.f32 %v421
        %vm534 = vweird.f32 %v527
        %vm535 = vmor %vm533, %vm534
        %v536 = vsel %vm535, %v527, %v532
        %v537 = vrsqrt.pop %v422
        %v538 = vmul.f32 %v537, %v422
        %v539 = vmul.f32 %v538, %v537
        %v540 = vmul.f32 0.5, %v539
        %v541 = vsub.f32 1.5, %v540
        %v542 = vmul.f32 %v537, %v541
        %vm543 = vweird.f32 %v422
        %vm544 = vweird.f32 %v537
        %vm545 = vmor %vm543, %vm544
        %v546 = vsel %vm545, %v537, %v542
        %v547 = vrsqrt.pop %v423
        %v548 = vmul.f32 %v547, %v423
        %v549 = vmul.f32 %v548, %v547
        %v550 = vmul.f32 0.5, %v549
        %v551 = vsub.f32 1.5, %v550
        %v552 = vmul.f32 %v547, %v551
        %vm553 = vweird.f32 %v423
        %vm554 = vweird.f32 %v547
        %vm555 = vmor %vm553, %vm554
        %v556 = vsel %vm555, %v547, %v552
        %v557 = vrsqrt.pop %v424
        %v558 = vmul.f32 %v557, %v424
        %v559 = vmul.f32 %v558, %v557
        %v560 = vmul.f32 0.5, %v559
        %v561 = vsub.f32 1.5, %v560
        %v562 = vmul.f32 %v557, %v561
        %vm563 = vweird.f32 %v424
        %vm564 = vweird.f32 %v557
        %vm565 = vmor %vm563, %vm564
        %v566 = vsel %vm565, %v557, %v562
        %v567 = vrsqrt.pop %v425
        %v568 = vmul.f32 %v567, %v425
        %v569 = vmul.f32 %v568, %v567
        %v570 = vmul.f32 0.5, %v569
        %v571 = vsub.f32 1.5, %v570
        %v572 = vmul.f32 %v567, %v571
        %vm573 = vweird.f32 %v425
        %vm574 = vweird.f32 %v567
        %vm575 = vmor %vm573, %vm574
        %v576 = vsel %vm575, %v567, %v572
        %v577 = vrsqrt.pop %v426
        %v578 = vmul.f32 %v577, %v426
        %v579 = vmul.f32 %v578, %v577
        %v580 = vmul.f32 0.5, %v579
        %v581 = vsub.f32 1.5, %v580
        %v582 = vmul.f32 %v577, %v581
        %vm583 = vweird.f32 %v426
        %vm584 = vweird.f32 %v577
        %vm585 = vmor %vm583, %vm584
        %v586 = vsel %vm585, %v577, %v582
        %v587 = vmul.f32 %v139, %v436
        %v588 = vmul.f32 %v140, %v446
        %v589 = vmul.f32 %v141, %v456
        %v590 = vmul.f32 %v142, %v466
        %v591 = vmul.f32 %v143, %v476
        %v592 = vmul.f32 %v144, %v486
        %v593 = vmul.f32 %v145, %v496
        %v594 = vmul.f32 %v146, %v506
        %v595 = vmul.f32 %v147, %v516
        %v596 = vmul.f32 %v148, %v526
        %v597 = vmul.f32 %v149, %v536
        %v598 = vmul.f32 %v150, %v546
        %v599 = vmul.f32 %v151, %v556
        %v600 = vmul.f32 %v152, %v566
        %v601 = vmul.f32 %v153, %v576
        %v602 = vmul.f32 %v154, %v586
        %v603 = vmul.f32 %v155, %v436
        %v604 = vmul.f32 %v156, %v446
        %v605 = vmul.f32 %v157, %v456
        %v606 = vmul.f32 %v158, %v466
        %v607 = vmul.f32 %v159, %v476
        %v608 = vmul.f32 %v160, %v486
        %v609 = vmul.f32 %v161, %v496
        %v610 = vmul.f32 %v162, %v506
        %v611 = vmul.f32 %v163, %v516
        %v612 = vmul.f32 %v164, %v526
        %v613 = vmul.f32 %v165, %v536
        %v614 = vmul.f32 %v166, %v546
        %v615 = vmul.f32 %v167, %v556
        %v616 = vmul.f32 %v168, %v566
        %v617 = vmul.f32 %v169, %v576
        %v618 = vmul.f32 %v170, %v586
        %v619 = vmul.f32 %v171, %v436
        %v620 = vmul.f32 %v172, %v446
        %v621 = vmul.f32 %v173, %v456
        %v622 = vmul.f32 %v174, %v466
        %v623 = vmul.f32 %v175, %v476
        %v624 = vmul.f32 %v176, %v486
        %v625 = vmul.f32 %v177, %v496
        %v626 = vmul.f32 %v178, %v506
        %v627 = vmul.f32 %v179, %v516
        %v628 = vmul.f32 %v180, %v526
        %v629 = vmul.f32 %v181, %v536
        %v630 = vmul.f32 %v182, %v546
        %v631 = vmul.f32 %v183, %v556
        %v632 = vmul.f32 %v184, %v566
        %v633 = vmul.f32 %v185, %v576
        %v634 = vmul.f32 %v186, %v586
        %v635 = vmul.f32 %v187, %v436
        %v636 = vmul.f32 %v188, %v446
        %v637 = vmul.f32 %v189, %v456
        %v638 = vmul.f32 %v190, %v466
        %v639 = vmul.f32 %v191, %v476
        %v640 = vmul.f32 %v192, %v486
        %v641 = vmul.f32 %v193, %v496
        %v642 = vmul.f32 %v194, %v506
        %v643 = vmul.f32 %v195, %v516
        %v644 = vmul.f32 %v196, %v526
        %v645 = vmul.f32 %v197, %v536
        %v646 = vmul.f32 %v198, %v546
        %v647 = vmul.f32 %v199, %v556
        %v648 = vmul.f32 %v200, %v566
        %v649 = vmul.f32 %v201, %v576
        %v650 = vmul.f32 %v202, %v586
        %651 = vst [vmem:[%s136] sm:$0xff] %v587
        %652 = vst [vmem:[%s136 + $0x8] sm:$0xff] %v588
        %653 = vst [vmem:[%s136 + $0x10] sm:$0xff] %v589
        %654 = vst [vmem:[%s136 + $0x18] sm:$0xff] %v590
        %655 = vst [vmem:[%s136 + $0x20] sm:$0xff] %v591
        %656 = vst [vmem:[%s136 + $0x28] sm:$0xff] %v592
        %657 = vst [vmem:[%s136 + $0x30] sm:$0xff] %v593
        %658 = vst [vmem:[%s136 + $0x38] sm:$0xff] %v594
        %659 = vst [vmem:[%s136 + $0x40] sm:$0xff] %v595
        %660 = vst [vmem:[%s136 + $0x48] sm:$0xff] %v596
        %661 = vst [vmem:[%s136 + $0x50] sm:$0xff] %v597
        %662 = vst [vmem:[%s136 + $0x58] sm:$0xff] %v598
        %663 = vst [vmem:[%s136 + $0x60] sm:$0xff] %v599
        %664 = vst [vmem:[%s136 + $0x68] sm:$0xff] %v600
        %665 = vst [vmem:[%s136 + $0x70] sm:$0xff] %v601
        %666 = vst [vmem:[%s136 + $0x78] sm:$0xff] %v602
        %667 = vst [vmem:[%s136 + $0x80] sm:$0xff] %v603
        %668 = vst [vmem:[%s136 + $0x88] sm:$0xff] %v604
        %669 = vst [vmem:[%s136 + $0x90] sm:$0xff] %v605
        %670 = vst [vmem:[%s136 + $0x98] sm:$0xff] %v606
        %671 = vst [vmem:[%s136 + $0xa0] sm:$0xff] %v607
        %672 = vst [vmem:[%s136 + $0xa8] sm:$0xff] %v608
        %673 = vst [vmem:[%s136 + $0xb0] sm:$0xff] %v609
        %674 = vst [vmem:[%s136 + $0xb8] sm:$0xff] %v610
        %675 = vst [vmem:[%s136 + $0xc0] sm:$0xff] %v611
        %676 = vst [vmem:[%s136 + $0xc8] sm:$0xff] %v612
        %677 = vst [vmem:[%s136 + $0xd0] sm:$0xff] %v613
        %678 = vst [vmem:[%s136 + $0xd8] sm:$0xff] %v614
        %679 = vst [vmem:[%s136 + $0xe0] sm:$0xff] %v615
        %680 = vst [vmem:[%s136 + $0xe8] sm:$0xff] %v616
        %681 = vst [vmem:[%s136 + $0xf0] sm:$0xff] %v617
        %682 = vst [vmem:[%s136 + $0xf8] sm:$0xff] %v618
        %683 = vst [vmem:[%s136 + $0x100] sm:$0xff] %v619
        %684 = vst [vmem:[%s136 + $0x108] sm:$0xff] %v620
        %685 = vst [vmem:[%s136 + $0x110] sm:$0xff] %v621
        %686 = vst [vmem:[%s136 + $0x118] sm:$0xff] %v622
        %687 = vst [vmem:[%s136 + $0x120] sm:$0xff] %v623
        %688 = vst [vmem:[%s136 + $0x128] sm:$0xff] %v624
        %689 = vst [vmem:[%s136 + $0x130] sm:$0xff] %v625
        %690 = vst [vmem:[%s136 + $0x138] sm:$0xff] %v626
        %691 = vst [vmem:[%s136 + $0x140] sm:$0xff] %v627
        %692 = vst [vmem:[%s136 + $0x148] sm:$0xff] %v628
        %693 = vst [vmem:[%s136 + $0x150] sm:$0xff] %v629
        %694 = vst [vmem:[%s136 + $0x158] sm:$0xff] %v630
        %695 = vst [vmem:[%s136 + $0x160] sm:$0xff] %v631
        %696 = vst [vmem:[%s136 + $0x168] sm:$0xff] %v632
        %697 = vst [vmem:[%s136 + $0x170] sm:$0xff] %v633
        %698 = vst [vmem:[%s136 + $0x178] sm:$0xff] %v634
        %699 = vst [vmem:[%s136 + $0x180] sm:$0xff] %v635
        %700 = vst [vmem:[%s136 + $0x188] sm:$0xff] %v636
        %701 = vst [vmem:[%s136 + $0x190] sm:$0xff] %v637
        %702 = vst [vmem:[%s136 + $0x198] sm:$0xff] %v638
        %703 = vst [vmem:[%s136 + $0x1a0] sm:$0xff] %v639
        %704 = vst [vmem:[%s136 + $0x1a8] sm:$0xff] %v640
        %705 = vst [vmem:[%s136 + $0x1b0] sm:$0xff] %v641
        %706 = vst [vmem:[%s136 + $0x1b8] sm:$0xff] %v642
        %707 = vst [vmem:[%s136 + $0x1c0] sm:$0xff] %v643
        %708 = vst [vmem:[%s136 + $0x1c8] sm:$0xff] %v644
        %709 = vst [vmem:[%s136 + $0x1d0] sm:$0xff] %v645
        %710 = vst [vmem:[%s136 + $0x1d8] sm:$0xff] %v646
        %711 = vst [vmem:[%s136 + $0x1e0] sm:$0xff] %v647
        %712 = vst [vmem:[%s136 + $0x1e8] sm:$0xff] %v648
        %713 = vst [vmem:[%s136 + $0x1f0] sm:$0xff] %v649
        %714 = vst [vmem:[%s136 + $0x1f8] sm:$0xff] %v650
        %s715 = sand.u32 %s52, 1
        %s716 = scalar_lea.sflag [#allocation4], %s715
        %s717 = sand.u32 %s52, 1
        %s718 = smul.addr %s717, 512
        %s719 = scalar_lea.vmem [#allocation5], %s718
        // Predicated region
        $region29: #{tpu_custom_call.1} parent=23 // pred_check
          %p720 = pneg %p62
        $region30: #{tpu_custom_call.1} parent=23 // pred_check_branch
          %722 = sbr.rel (%p720) target = $region32
        $region31: #{tpu_custom_call.1} parent=23 // pred_region
          %s723 = smul.u32 16, %s18
          %725 = vsyncadd %s716, 0
          %s726 = smul.addr %s723, 8
          %s727 = scalar_lea.hbm %s1, %s726
          %s728 = sshll.u32 %s719, 4
          %s729 = int_to_ptr.vmem [resolvable:$true] %s728
          %s730 = sshll.u32 %s727, 4
          %s731 = int_to_ptr.hbm [resolvable:$true] %s730
          %736 = dma.vmem_to_hbm [thread:$0]  %s729, 8192, %s731, %s716, 2048, 4096, 128
        $region32: #{tpu_custom_call.1} parent=23 // pred_fallthru
          _
      $region24: #{tpu_custom_call.1} parent=5 // pred_fallthru
        _
      %p737 = scmp.le.s32.totalorder 2, %s13
      // Predicated region
      $region33: #{tpu_custom_call.1} parent=5 // pred_check
        %p738 = pneg %p737
      $region34: #{tpu_custom_call.1} parent=5 // pred_check_branch
        %740 = sbr.rel (%p738) target = $region36
      $region35: #{tpu_custom_call.1} parent=5 // pred_region
        %s741 = ssub.s32 %s13, 2
        // Predicated region
        $region37: #{tpu_custom_call.1} parent=35 // pred_check
          %p742 = pneg %p68
        $region38: #{tpu_custom_call.1} parent=35 // pred_check_branch
          %744 = sbr.rel (%p742) target = $region40
        $region39: #{tpu_custom_call.1} parent=35 // pred_region
          %s745 = sand.u32 %s53, 1
          %s746 = scalar_lea.sflag [#allocation4], %s745
          %s747 = sand.u32 %s53, 1
          %s748 = smul.addr %s747, 512
          %s749 = scalar_lea.vmem [#allocation5], %s748
          %751 = dma.done %s746, 8192
        $region40: #{tpu_custom_call.1} parent=35 // pred_fallthru
          _
      $region36: #{tpu_custom_call.1} parent=5 // pred_fallthru
        _
    $region6: #{tpu_custom_call.1} parent=1 // loop_footer
      %s17 = sadd.s32 1, %s13
    $region7: #{tpu_custom_call.1} parent=1 // loop_footer_branch
      %12 = sbr.rel target = $region3
    $region8: #{tpu_custom_call.1} parent=1 // loop_exit
      _
    %752 = vsyncpa [#allocation3], 1
    %s753 = scalar_lea.sflag [#allocation3], 1
    %754 = vsyncpa %s753, 1
    %755 = vsyncpa [#allocation4], 1
    %s756 = scalar_lea.sflag [#allocation4], 1
    %757 = vsyncpa %s756, 1

</llo_original>
